<compile_context>
chip_gen: v5e
topology: v5e:2x2
jax: 0.10.0
libtpu: 0.0.40
codegen_flags: <defaults>
</compile_context>

<pallas_src>
import math

import jax
import jax.numpy as jnp
from jax.experimental import pallas as pl
from jax.experimental.pallas import tpu as pltpu


_PALLAS_MIN_BYTES = 1 << 20         # below ~1 MiB, native XLA slicing wins
_MEGACORE_SPLIT_BYTES = 512 << 10   # force >=2 grid steps above this size


def _largest_divisor(n, cap, multiple_of=1):
    """Largest d with d | n, d <= cap, multiple_of | d.  Returns 0 if none."""
    if n <= 0 or cap <= 0:
        return 0
    best = 0
    i = 1
    while i * i <= n:
        if n % i == 0:
            for d in (i, n // i):
                if d <= cap and d % multiple_of == 0 and d > best:
                    best = d
        i += 1
    return best


def _tpu_budgets():
    """(per-operand block budget bytes, vmem_limit_bytes), generation-aware."""
    budget, limit = 2 << 20, 32 << 20              # safe defaults
    try:
        vmem = pltpu.get_tpu_info().vmem_capacity_bytes
        if vmem >= (100 << 20):                     # v5e / v6e: 128 MiB VMEM
            budget, limit = 4 << 20, 64 << 20
        else:                                       # v7x: 64 MiB VMEM
            budget, limit = 2 << 20, 40 << 20
    except Exception:
        pass
    return budget, limit


def _pick_blocks_2d(pre, s_cols, itemsize, budget_bytes):
    """Pick (pre_blk, col_blk) for the dense (pre, n*post) view, or None."""
    budget_elems = max(128, budget_bytes // itemsize)

    # Lane (column) block: largest multiple-of-128 divisor of s_cols in budget.
    col_blk = _largest_divisor(s_cols, min(s_cols, budget_elems), multiple_of=128)
    if col_blk == 0:
        return None

    # Sublane (row) block: multiple-of-8 divisor within the remaining budget,
    # else the full extent (full extent is always layout-legal).
    row_budget = max(1, budget_elems // col_blk)
    if pre <= row_budget:
        pre_blk = pre
    else:
        d = _largest_divisor(pre, min(pre, row_budget), multiple_of=8)
        pre_blk = d if d else pre

    # Never emit a block far past the VMEM budget (8 live buffers downstream).
    if pre_blk * col_blk * itemsize > 2 * budget_bytes:
        return None

    # Megacore: large problems should expose >= 2 steps on a "parallel" axis.
    half_bytes = pre * s_cols * itemsize
    if pre_blk == pre and col_blk == s_cols and half_bytes >= _MEGACORE_SPLIT_BYTES:
        if (s_cols // 2) % 128 == 0:
            col_blk = s_cols // 2
        elif pre % 2 == 0 and (pre // 2) % 8 == 0:
            pre_blk = pre // 2

    return pre_blk, col_blk


def _chunk2_reference(x, dim):
    """Plain-JAX fallback == torch.chunk(x, 2, dim) semantics."""
    dim = dim % x.ndim
    n = x.shape[dim]
    s0 = -(-n // 2)  # ceil(n/2): first chunk gets the larger half
    a = jax.lax.slice_in_dim(x, 0, s0, axis=dim)
    b = jax.lax.slice_in_dim(x, s0, n, axis=dim)
    return a, b


def _chunk2_pallas_2d(x, dim, pre, s, post, pre_blk, col_blk, vmem_limit):
    """Tiled, pipelined Pallas split along `dim` via a dense 2-D view."""
    ndim = x.ndim
    n = x.shape[dim]
    itemsize = x.dtype.itemsize
    s_cols = s * post

    # Free (row-major) collapse: sublane- and lane-dense trailing pair.
    xr = x.reshape(pre, n * post)

    grid = (pre // pre_blk, s_cols // col_blk)
    blk = (pre_blk, col_blk)
    col_half_blocks = s_cols // col_blk   # block offset of the second half in xr

    def kernel(xa_ref, xb_ref, a_ref, b_ref):
        # Pure tile copies; the half-offset lives in the input index_maps.
        a_ref[...] = xa_ref[...]
        b_ref[...] = xb_ref[...]

    half = jax.ShapeDtypeStruct((pre, s_cols), x.dtype)

    a2, b2 = pl.pallas_call(
        kernel,
        out_shape=(half, half),
        grid=grid,
        in_specs=[
            # First half of x (same HBM array passed twice, two index_maps).
            pl.BlockSpec(blk, lambda i, j: (i, j)),
            # Second half: offset by s*post (in units of column blocks).
            pl.BlockSpec(blk, lambda i, j: (i, j + col_half_blocks)),
        ],
        out_specs=(
            pl.BlockSpec(blk, lambda i, j: (i, j)),
            pl.BlockSpec(blk, lambda i, j: (i, j)),
        ),
        compiler_params=pltpu.CompilerParams(
            dimension_semantics=("parallel", "parallel"),
            vmem_limit_bytes=vmem_limit,
        ),
        cost_estimate=pl.CostEstimate(
            flops=0,
            transcendentals=0,
            bytes_accessed=int(2 * x.size * itemsize),  # read x once, write once
        ),
    )(xr, xr)

    out_shape = tuple(s if d == dim else x.shape[d] for d in range(ndim))
    return a2.reshape(out_shape), b2.reshape(out_shape)


def chunk2(x, dim, *, force_pallas=False):
    """Equivalent of torch.chunk(x, chunks=2, dim=dim) -> (a, b)."""
    ndim = x.ndim
    d = dim % ndim
    n = x.shape[d]

    if x.size == 0 or n % 2 != 0:
        # TODO(synk): odd split extents (ceil/floor halves) stay on the XLA slice path.
        return _chunk2_reference(x, d)

    s = n // 2
    pre = math.prod(x.shape[:d]) if d > 0 else 1
    post = math.prod(x.shape[d + 1:]) if d < ndim - 1 else 1
    s_cols = s * post
    itemsize = x.dtype.itemsize
    nbytes = x.size * itemsize

    if not force_pallas and nbytes < _PALLAS_MIN_BYTES:
        return _chunk2_reference(x, d)
    if s_cols % 128 != 0:
        # Narrow / misaligned lane extent (e.g. last-dim split): XLA slice
        # avoids padded vregs and masked partial stores.
        return _chunk2_reference(x, d)

    budget, vmem_limit = _tpu_budgets()
    blocks = _pick_blocks_2d(pre, s_cols, itemsize, budget)
    if blocks is None:
        return _chunk2_reference(x, d)
    pre_blk, col_blk = blocks
    return _chunk2_pallas_2d(x, d, pre, s, post, pre_blk, col_blk, vmem_limit)


if __name__ == "__main__":
    key = jax.random.PRNGKey(0)
    # Small NCHW-style input consistent with the test module.
    x = jax.random.normal(key, (2, 4, 16, 16), dtype=jnp.float32)

    # Primary case: chunk along channels (dim=1) — force the Pallas path.
    a, b = chunk2(x, 1, force_pallas=True)
    jax.block_until_ready((a, b))
    ref_a, ref_b = _chunk2_reference(x, 1)
    assert a.shape == ref_a.shape and b.shape == ref_b.shape
    assert jnp.array_equal(a, ref_a) and jnp.array_equal(b, ref_b)

    # Spatial dim (dim=2) through the same kernel (s*post = 128, lane-dense).
    a2, b2 = chunk2(x, 2, force_pallas=True)
    jax.block_until_ready((a2, b2))
    ref_a2, ref_b2 = _chunk2_reference(x, 2)
    assert jnp.array_equal(a2, ref_a2) and jnp.array_equal(b2, ref_b2)

    # Batch dim (dim=0) through the kernel (pre = 1 edge case).
    a0, b0 = chunk2(x, 0, force_pallas=True)
    jax.block_until_ready((a0, b0))
    ref_a0, ref_b0 = _chunk2_reference(x, 0)
    assert jnp.array_equal(a0, ref_a0) and jnp.array_equal(b0, ref_b0)

    # Last dim (dim=3): s*post = 8 < 128 -> dispatcher routes to the XLA path.
    a3, b3 = chunk2(x, 3, force_pallas=True)
    jax.block_until_ready((a3, b3))
    ref_a3, ref_b3 = _chunk2_reference(x, 3)
    assert jnp.array_equal(a3, ref_a3) and jnp.array_equal(b3, ref_b3)

    print("KERNEL_OK")
</pallas_src>

<mosaic_0001>
module attributes {stable_mosaic.version = 11 : i64} {
  func.func @kernel(%arg0: i32, %arg1: i32, %arg2: memref<2x512xf32, #tpu.memory_space<vmem>>, %arg3: memref<2x512xf32, #tpu.memory_space<vmem>>, %arg4: memref<2x512xf32, #tpu.memory_space<vmem>>, %arg5: memref<2x512xf32, #tpu.memory_space<vmem>>) attributes {dimension_semantics = [#tpu.dimension_semantics<parallel>, #tpu.dimension_semantics<parallel>], iteration_bounds = array<i64: 1, 1>, scalar_prefetch = 0 : i64, scratch_operands = 0 : i64, tpu.core_type = #tpu.core_type<tc>, window_params = [{transform_indices = @transform_0, window_bounds = array<i64: 2, 512>}, {transform_indices = @transform_1, window_bounds = array<i64: 2, 512>}, {transform_indices = @transform_2, window_bounds = array<i64: 2, 512>}, {transform_indices = @transform_3, window_bounds = array<i64: 2, 512>}]} {
    %c0 = arith.constant 0 : index
    %c0_0 = arith.constant 0 : index
    %0 = vector.load %arg2[%c0, %c0_0] : memref<2x512xf32, #tpu.memory_space<vmem>>, vector<2x512xf32>
    %c0_1 = arith.constant 0 : index
    %c0_2 = arith.constant 0 : index
    %1 = vector.load %arg4[%c0_1, %c0_2] : memref<2x512xf32, #tpu.memory_space<vmem>>, vector<2x512xf32>
    tpu.vector_store %arg4[%c0_1, %c0_2], %0 {strides = array<i32>} : memref<2x512xf32, #tpu.memory_space<vmem>>, vector<2x512xf32>,
    %c0_3 = arith.constant 0 : index
    %c0_4 = arith.constant 0 : index
    %2 = vector.load %arg3[%c0_3, %c0_4] : memref<2x512xf32, #tpu.memory_space<vmem>>, vector<2x512xf32>
    %c0_5 = arith.constant 0 : index
    %c0_6 = arith.constant 0 : index
    %3 = vector.load %arg5[%c0_5, %c0_6] : memref<2x512xf32, #tpu.memory_space<vmem>>, vector<2x512xf32>
    tpu.vector_store %arg5[%c0_5, %c0_6], %2 {strides = array<i32>} : memref<2x512xf32, #tpu.memory_space<vmem>>, vector<2x512xf32>,
    return
  }
  func.func @transform_0(%arg0: i32, %arg1: i32) -> (i32, i32) {
    %c0_i32 = arith.constant 0 : i32
    return %arg0, %arg1 : i32, i32
  }
  func.func @transform_1(%arg0: i32, %arg1: i32) -> (i32, i32) {
    %c1_i32 = arith.constant 1 : i32
    %0 = arith.addi %arg1, %c1_i32 : i32
    %c0_i32 = arith.constant 0 : i32
    return %arg0, %0 : i32, i32
  }
  func.func @transform_2(%arg0: i32, %arg1: i32) -> (i32, i32) {
    %c0_i32 = arith.constant 0 : i32
    return %arg0, %arg1 : i32, i32
  }
  func.func @transform_3(%arg0: i32, %arg1: i32) -> (i32, i32) {
    %c0_i32 = arith.constant 0 : i32
    return %arg0, %arg1 : i32, i32
  }
}

</mosaic_0001>

<llo_original>
// kernel: tpu_custom_call.1
$region0: #{tpu_custom_call.1}
  #allocation0 [shape = 'u32[]', space=smem, size = 0x4, offset = 0x4, fixed_abs, tag = 'smem constant byte address 0x4 - core index']
  #allocation1 [shape = 'u32[72,128]{1,0:T(1,128)}', space=vmem, size = 0x9000, scoped, tag = 'internal scratch']
  %s0 = inlined_call_operand.hbm [shape: f32[2,1024], index: 0, kind: input, shape index: {}]
  %s1 = inlined_call_operand.hbm [shape: f32[2,1024], index: 1, kind: input, shape index: {}]
  %s2 = inlined_call_operand.hbm [shape: f32[2,512], index: 2, kind: output, shape index: {0}]
  %s3 = inlined_call_operand.hbm [shape: f32[2,512], index: 3, kind: output, shape index: {1}]
  %4 = xla_tuple %s2, %s3
  %s5 = sld [smem:[#allocation0]]
  $region34: #{tpu_custom_call.1} parent=0
    _
  %s7 = ssub.s32 1, %s5
  %s8 = scalar_select 0, %s7, %s5
  $region1: #{tpu_custom_call.1} parent=0
    #allocation2 [shape = 'u8[4096]{0}', space=vmem, size = 0x1000, scoped, tag = 'input window, operand 0, single buffered']
    #allocation3 [shape = 's32[1]{0}', space=sflag, size = 0x4, scoped, tag = 'scoped memory for tpu_custom_call.1']
    #allocation4 [shape = 's32[1]{0}', space=sflag, size = 0x4, scoped, tag = 'scoped memory for tpu_custom_call.1']
    #allocation5 [shape = 'u8[4096]{0}', space=vmem, size = 0x1000, scoped, tag = 'input window, operand 1, single buffered']
    #allocation6 [shape = 's32[1]{0}', space=sflag, size = 0x4, scoped, tag = 'scoped memory for tpu_custom_call.1']
    #allocation7 [shape = 'u8[4096]{0}', space=vmem, size = 0x1000, scoped, tag = 'output window, operand 0, single buffered']
    #allocation8 [shape = 'u8[4096]{0}', space=vmem, size = 0x1000, scoped, tag = 'output window, operand 1, single buffered']
    #allocation9 [shape = 's32[1]{0}', space=sflag, size = 0x4, scoped, tag = 'scoped memory for tpu_custom_call.1']
    %9 = vsyncpa [#allocation3], 0
    %10 = vsyncpa [#allocation6], 0
    %11 = vsyncpa [#allocation4], 0
    %12 = vsyncpa [#allocation9], 0
    // Predicated region
    $region2: #{tpu_custom_call.1} parent=1 // pred_check
      _
    $region3: #{tpu_custom_call.1} parent=1 // pred_check_branch
      %14 = sbr.rel (0) target = $region5
    $region4: #{tpu_custom_call.1} parent=1 // pred_region
      %16 = vsyncadd [#allocation3], 0
      %s18 = sshll.u32 %s0, 4
      %s19 = int_to_ptr.hbm [resolvable:$true] %s18
      %s20 = sshll.u32 [#allocation2], 4
      %s21 = int_to_ptr.vmem [resolvable:$true] %s20
      %23 = dma.hbm_to_vmem [thread:$0]  %s19, 128, %s21, [#allocation3]
    $region5: #{tpu_custom_call.1} parent=1 // pred_fallthru
      _
    // Predicated region
    $region6: #{tpu_custom_call.1} parent=1 // pred_check
      _
    $region7: #{tpu_custom_call.1} parent=1 // pred_check_branch
      %25 = sbr.rel (0) target = $region9
    $region8: #{tpu_custom_call.1} parent=1 // pred_region
      %s26 = sadd.s32 0, 1
      %s27 = smul.u32 4, %s26
      %29 = vsyncadd [#allocation6], 0
      %s30 = smul.addr %s27, 2
      %s31 = scalar_lea.hbm %s1, %s30
      %s33 = sshll.u32 %s31, 4
      %s34 = int_to_ptr.hbm [resolvable:$true] %s33
      %s35 = sshll.u32 [#allocation5], 4
      %s36 = int_to_ptr.vmem [resolvable:$true] %s35
      %38 = dma.hbm_to_vmem [thread:$0]  %s34, 128, %s36, [#allocation6]
    $region9: #{tpu_custom_call.1} parent=1 // pred_fallthru
      _
    // Predicated region
    $region10: #{tpu_custom_call.1} parent=1 // pred_check
      _
    $region11: #{tpu_custom_call.1} parent=1 // pred_check_branch
      %40 = sbr.rel (0) target = $region13
    $region12: #{tpu_custom_call.1} parent=1 // pred_region
      %42 = dma.done [#allocation3], 128
    $region13: #{tpu_custom_call.1} parent=1 // pred_fallthru
      _
    // Predicated region
    $region14: #{tpu_custom_call.1} parent=1 // pred_check
      _
    $region15: #{tpu_custom_call.1} parent=1 // pred_check_branch
      %44 = sbr.rel (0) target = $region17
    $region16: #{tpu_custom_call.1} parent=1 // pred_region
      %46 = dma.done [#allocation6], 128
    $region17: #{tpu_custom_call.1} parent=1 // pred_fallthru
      _
    %s47 = sadd.s32 0, 1
    %s48 = smul.u32 4, %s47
    %v49 = vld [vmem:[#allocation2] sm:$0xff]
    %50 = vst [vmem:[#allocation7] sm:$0xff] %v49
    %v51 = vld [vmem:[#allocation5] sm:$0xff]
    %52 = vst [vmem:[#allocation8] sm:$0xff] %v51
    // Predicated region
    $region18: #{tpu_custom_call.1} parent=1 // pred_check
      _
    $region19: #{tpu_custom_call.1} parent=1 // pred_check_branch
      %54 = sbr.rel (0) target = $region21
    $region20: #{tpu_custom_call.1} parent=1 // pred_region
      %56 = vsyncadd [#allocation4], 0
      %s58 = sshll.u32 [#allocation7], 4
      %s59 = int_to_ptr.vmem [resolvable:$true] %s58
      %s60 = sshll.u32 %s2, 4
      %s61 = int_to_ptr.hbm [resolvable:$true] %s60
      %63 = dma.vmem_to_hbm [thread:$0]  %s59, 128, %s61, [#allocation4]
    $region21: #{tpu_custom_call.1} parent=1 // pred_fallthru
      _
    // Predicated region
    $region22: #{tpu_custom_call.1} parent=1 // pred_check
      _
    $region23: #{tpu_custom_call.1} parent=1 // pred_check_branch
      %65 = sbr.rel (0) target = $region25
    $region24: #{tpu_custom_call.1} parent=1 // pred_region
      %67 = vsyncadd [#allocation9], 0
      %s69 = sshll.u32 [#allocation8], 4
      %s70 = int_to_ptr.vmem [resolvable:$true] %s69
      %s71 = sshll.u32 %s3, 4
      %s72 = int_to_ptr.hbm [resolvable:$true] %s71
      %74 = dma.vmem_to_hbm [thread:$0]  %s70, 128, %s72, [#allocation9]
    $region25: #{tpu_custom_call.1} parent=1 // pred_fallthru
      _
    // Predicated region
    $region26: #{tpu_custom_call.1} parent=1 // pred_check
      _
    $region27: #{tpu_custom_call.1} parent=1 // pred_check_branch
      %76 = sbr.rel (0) target = $region29
    $region28: #{tpu_custom_call.1} parent=1 // pred_region
      %78 = dma.done [#allocation4], 128
    $region29: #{tpu_custom_call.1} parent=1 // pred_fallthru
      _
    // Predicated region
    $region30: #{tpu_custom_call.1} parent=1 // pred_check
      _
    $region31: #{tpu_custom_call.1} parent=1 // pred_check_branch
      %80 = sbr.rel (0) target = $region33
    $region32: #{tpu_custom_call.1} parent=1 // pred_region
      %82 = dma.done [#allocation9], 128
    $region33: #{tpu_custom_call.1} parent=1 // pred_fallthru
      _
    %83 = vsyncpa [#allocation3], 1
    %84 = vsyncpa [#allocation6], 1
    %85 = vsyncpa [#allocation4], 1
    %86 = vsyncpa [#allocation9], 1

</llo_original>
